<compile_context>
chip_gen: v7x
topology: tpu7x:2x2x1
jax: 0.10.0
libtpu: 0.0.40
codegen_flags: <defaults>
</compile_context>

<pallas_src>
import jax
import jax.numpy as jnp
from jax.experimental import pallas as pl
from jax.experimental.pallas import tpu as pltpu


_VMEM_LIMIT_BYTES = 48 * 1024 * 1024  # < v7x 64 MiB physical; fine on v5e/v6e.


def _bce_elementwise(x, z):
    # Numerically stable BCE-with-logits, elementwise (VPU + EUP), f32.
    return jnp.maximum(x, 0.0) - x * z + jnp.log1p(jnp.exp(-jnp.abs(x)))


def _make_flat_kernel(L, S, has_mask):
    """Lane-dense fast path kernel.

    Blocks are [tr, 128]; each 128-lane row holds S = 128//L consecutive
    batch rows of L elements.  Output block is [tr, S]:
      out[r, s] = mean of the s-th length-L lane segment of row r.
    """
    inv_L = float(1.0 / L)  # L | 128 -> power of two -> exact in bf16.

    def kernel(*refs):
        if has_mask:
            x_ref, z_ref, m_ref, o_ref = refs
        else:
            x_ref, z_ref, o_ref = refs
        x = x_ref[...].astype(jnp.float32)
        z = z_ref[...].astype(jnp.float32)
        loss = _bce_elementwise(x, z)
        if has_mask:
            loss = loss * m_ref[...].astype(jnp.float32)

        # Segment-mean matrix (128, 128): column s (< S) holds 1/L on lanes
        # [s*L, (s+1)*L), zero elsewhere (columns >= S are all zero).  Built
        # from iotas each step: ~1 vreg of VPU work, negligible.
        lane = jax.lax.broadcasted_iota(jnp.int32, (128, 128), 0)
        seg = jax.lax.broadcasted_iota(jnp.int32, (128, 128), 1)
        seg_mat = jnp.where(
            (lane >= seg * L) & (lane < (seg + 1) * L),
            jnp.float32(inv_L), jnp.float32(0.0)).astype(jnp.bfloat16)

        # Segment reduction on the otherwise-idle MXU.  hi/lo bf16 split keeps
        # the result exact to ~1e-6 (loss >= 0, weights are exact in bf16),
        # independent of how f32 matmuls would be lowered.
        hi = loss.astype(jnp.bfloat16)
        lo = (loss - hi.astype(jnp.float32)).astype(jnp.bfloat16)
        acc = jnp.dot(hi, seg_mat, preferred_element_type=jnp.float32)
        acc = acc + jnp.dot(lo, seg_mat, preferred_element_type=jnp.float32)
        o_ref[...] = acc[:, :S].astype(o_ref.dtype)

    return kernel


def _make_rows_kernel(L, has_mask):
    """Generic fallback: natural [tb, L] blocks, reduce over the lane axis."""
    inv_L = float(1.0 / L)

    def kernel(*refs):
        if has_mask:
            x_ref, z_ref, m_ref, o_ref = refs
        else:
            x_ref, z_ref, o_ref = refs
        x = x_ref[...].astype(jnp.float32)
        z = z_ref[...].astype(jnp.float32)
        loss = _bce_elementwise(x, z)
        if has_mask:
            loss = loss * m_ref[...].astype(jnp.float32)
        o_ref[...] = (jnp.sum(loss, axis=1, keepdims=True) * inv_L
                      ).astype(o_ref.dtype)

    return kernel


def _choose_tile_rows(total_rows, n_inputs, target_bytes=8 * 1024 * 1024):
    """Rows (second-minor dim) per grid step.

    Sized so one step's f32, lane-padded working set is ~target_bytes
    (per input: rows * 128 lanes * 4 B).  Double-buffered inputs plus
    in-kernel f32 temporaries then stay comfortably under the 48 MiB VMEM
    limit we request (itself < v7x's 64 MiB physical VMEM).  ~8 MiB/step keeps
    the ~0.35 us per-step pipeline overhead around 5%.
    """
    bytes_per_row = n_inputs * 128 * 4
    tr = max(8, (target_bytes // bytes_per_row) // 8 * 8)
    if tr >= total_rows:
        # Keep >= 2 grid steps when there is enough work so v7x can shard the
        # "parallel" axis across its two TensorCores.
        if total_rows >= 16:
            tr = (((total_rows + 1) // 2) + 7) // 8 * 8
        else:
            tr = total_rows
    return tr


def sigmoid_bce_loss(inputs, target, mask=None, *, tile_rows=None):
    """Pallas equivalent of SigmoidBCELoss.forward.

    inputs/target/mask: [B, L] -> returns [B] (float32): per-row mean of the
    (optionally mask-weighted) BCE-with-logits loss.
    """
    B, L = inputs.shape
    has_mask = mask is not None
    operands = [inputs, target] + ([mask] if has_mask else [])
    n_in = len(operands)

    use_flat = (L <= 128) and (128 % L == 0) and (B % (128 // L) == 0)

    if use_flat:
        S = 128 // L                      # batch rows per 128-lane row
        N = (B * L) // 128                # flat rows
        tr = tile_rows if tile_rows is not None else _choose_tile_rows(N, n_in)
        grid = (pl.cdiv(N, tr),)
        # Row-major reshape: free (or fusible) relayout, no transpose pass.
        call_ops = [op.reshape(N, 128) for op in operands]
        in_specs = [pl.BlockSpec((tr, 128), lambda i: (i, 0))] * n_in
        out_specs = pl.BlockSpec((tr, S), lambda i: (i, 0))
        out_shape = jax.ShapeDtypeStruct((N, S), jnp.float32)
        kernel = _make_flat_kernel(L, S, has_mask)
        out_elems = N * S
    else:
        tr = tile_rows if tile_rows is not None else _choose_tile_rows(B, n_in)
        grid = (pl.cdiv(B, tr),)
        call_ops = operands               # natural [B, L] layout, no transpose
        in_specs = [pl.BlockSpec((tr, L), lambda i: (i, 0))] * n_in
        out_specs = pl.BlockSpec((tr, 1), lambda i: (i, 0))
        out_shape = jax.ShapeDtypeStruct((B, 1), jnp.float32)
        kernel = _make_rows_kernel(L, has_mask)
        out_elems = B

    bytes_in = sum(int(o.size) * jnp.dtype(o.dtype).itemsize for o in operands)
    out = pl.pallas_call(
        kernel,
        out_shape=out_shape,
        grid_spec=pl.GridSpec(grid=grid, in_specs=in_specs,
                              out_specs=out_specs),
        compiler_params=pltpu.CompilerParams(
            dimension_semantics=("parallel",),   # batch tiles are independent
            vmem_limit_bytes=_VMEM_LIMIT_BYTES,
            allow_input_fusion=[True] * n_in,    # let reshape/producers fuse in
        ),
        cost_estimate=pl.CostEstimate(
            flops=8 * B * L,
            transcendentals=2 * B * L,           # exp + log1p per element
            bytes_accessed=bytes_in + out_elems * 4,
        ),
    )(*call_ops)

    if use_flat:
        return out.reshape(B)                    # (N, S) -> (B,), tiny
    return out[:, 0]


def _reference(inputs, target, mask=None):
    x = inputs.astype(jnp.float32)
    z = target.astype(jnp.float32)
    l = jnp.maximum(x, 0.0) - x * z + jnp.log1p(jnp.exp(-jnp.abs(x)))
    if mask is not None:
        l = l * mask.astype(jnp.float32)
    return jnp.mean(l, axis=1)


if __name__ == "__main__":
    key = jax.random.PRNGKey(0)
    k = jax.random.split(key, 8)

    # Case 1: fast (lane-dense flat) path, masked, multiple grid steps
    # including a partial last tile (B*L = 3200 -> 25 flat rows, tile_rows=8).
    B1, L1 = 200, 16
    x1 = jax.random.normal(k[0], (B1, L1), dtype=jnp.float32) * 2.0
    z1 = (jax.random.uniform(k[1], (B1, L1)) > 0.5).astype(jnp.float32)
    m1 = (jax.random.uniform(k[2], (B1, L1)) > 0.25).astype(jnp.float32)
    out1 = jax.block_until_ready(sigmoid_bce_loss(x1, z1, m1, tile_rows=8))
    ref1 = _reference(x1, z1, m1)
    assert out1.shape == (B1,)
    assert jnp.allclose(out1, ref1, atol=1e-5, rtol=5e-5), (out1, ref1)

    # Case 2: fast path, no mask (2-input kernel), default tiling -> 2 even
    # tiles (48 flat rows -> 24 + 24), exercising the v7x two-step split.
    B2, L2 = 384, 16
    x2 = jax.random.normal(k[3], (B2, L2), dtype=jnp.float32) * 3.0
    z2 = (jax.random.uniform(k[4], (B2, L2)) > 0.5).astype(jnp.float32)
    out2 = jax.block_until_ready(sigmoid_bce_loss(x2, z2))
    ref2 = _reference(x2, z2)
    assert out2.shape == (B2,)
    assert jnp.allclose(out2, ref2, atol=1e-5, rtol=5e-5), (out2, ref2)

    # Case 3: generic fallback path (L=20 does not divide 128), bf16 inputs,
    # masked, partial last row tile (96 = 64 + 32).
    B3, L3 = 96, 20
    x3 = (jax.random.normal(k[5], (B3, L3)) * 2.0).astype(jnp.bfloat16)
    z3 = (jax.random.uniform(k[6], (B3, L3)) > 0.5).astype(jnp.bfloat16)
    m3 = (jax.random.uniform(k[7], (B3, L3)) > 0.25).astype(jnp.bfloat16)
    out3 = jax.block_until_ready(sigmoid_bce_loss(x3, z3, m3, tile_rows=64))
    ref3 = _reference(x3, z3, m3)
    assert out3.shape == (B3,)
    assert jnp.allclose(out3, ref3, atol=1e-5, rtol=1e-5), (out3, ref3)

    print("KERNEL_OK")
</pallas_src>

<mosaic_0001>
module attributes {stable_mosaic.version = 11 : i64} {
  func.func @kernel(%arg0: i32, %arg1: memref<8x128xf32, #tpu.memory_space<vmem>>, %arg2: memref<8x128xf32, #tpu.memory_space<vmem>>, %arg3: memref<8x128xf32, #tpu.memory_space<vmem>>, %arg4: memref<8x8xf32, #tpu.memory_space<vmem>>) attributes {dimension_semantics = [#tpu.dimension_semantics<parallel>], iteration_bounds = array<i64: 4>, scalar_prefetch = 0 : i64, scratch_operands = 0 : i64, tpu.core_type = #tpu.core_type<tc>, window_params = [{transform_indices = @transform_0, window_bounds = array<i64: 8, 128>}, {transform_indices = @transform_1, window_bounds = array<i64: 8, 128>}, {transform_indices = @transform_2, window_bounds = array<i64: 8, 128>}, {transform_indices = @transform_3, window_bounds = array<i64: 8, 8>}]} {
    %c0 = arith.constant 0 : index
    %c0_0 = arith.constant 0 : index
    %0 = vector.load %arg1[%c0, %c0_0] : memref<8x128xf32, #tpu.memory_space<vmem>>, vector<8x128xf32>
    %c0_1 = arith.constant 0 : index
    %c0_2 = arith.constant 0 : index
    %1 = vector.load %arg2[%c0_1, %c0_2] : memref<8x128xf32, #tpu.memory_space<vmem>>, vector<8x128xf32>
    %cst = arith.constant 0.000000e+00 : f32
    %2 = vector.broadcast %cst : f32 to vector<8x128xf32>
    %3 = arith.maximumf %0, %2 : vector<8x128xf32>
    %4 = arith.mulf %0, %1 : vector<8x128xf32>
    %5 = arith.subf %3, %4 : vector<8x128xf32>
    %6 = math.absf %0 : vector<8x128xf32>
    %cst_3 = arith.constant 0.000000e+00 : f32
    %7 = vector.broadcast %cst_3 : f32 to vector<8x128xf32>
    %8 = arith.subf %7, %6 : vector<8x128xf32>
    %9 = math.exp %8 : vector<8x128xf32>
    %10 = math.log1p %9 : vector<8x128xf32>
    %11 = arith.addf %5, %10 : vector<8x128xf32>
    %c0_4 = arith.constant 0 : index
    %c0_5 = arith.constant 0 : index
    %12 = vector.load %arg3[%c0_4, %c0_5] : memref<8x128xf32, #tpu.memory_space<vmem>>, vector<8x128xf32>
    %13 = arith.mulf %11, %12 : vector<8x128xf32>
    %14 = tpu.iota {dimensions = array<i32: 0>} : vector<128x128xi32>
    %15 = tpu.iota {dimensions = array<i32: 1>} : vector<128x128xi32>
    %c16_i32 = arith.constant 16 : i32
    %16 = vector.broadcast %c16_i32 : i32 to vector<128x128xi32>
    %17 = arith.muli %15, %16 : vector<128x128xi32>
    %18 = arith.cmpi sge, %14, %17 : vector<128x128xi32>
    %c1_i32 = arith.constant 1 : i32
    %19 = vector.broadcast %c1_i32 : i32 to vector<128x128xi32>
    %20 = arith.addi %15, %19 : vector<128x128xi32>
    %c16_i32_6 = arith.constant 16 : i32
    %21 = vector.broadcast %c16_i32_6 : i32 to vector<128x128xi32>
    %22 = arith.muli %20, %21 : vector<128x128xi32>
    %23 = arith.cmpi slt, %14, %22 : vector<128x128xi32>
    %24 = arith.andi %18, %23 : vector<128x128xi1>
    %cst_7 = arith.constant 6.250000e-02 : f32
    %cst_8 = arith.constant 0.000000e+00 : f32
    %25 = vector.broadcast %cst_7 : f32 to vector<128x128xf32>
    %26 = vector.broadcast %cst_8 : f32 to vector<128x128xf32>
    %27 = arith.select %24, %25, %26 : vector<128x128xi1>, vector<128x128xf32>
    %28 = arith.truncf %27 : vector<128x128xf32> to vector<128x128xbf16>
    %29 = arith.truncf %13 : vector<8x128xf32> to vector<8x128xbf16>
    %30 = arith.extf %29 : vector<8x128xbf16> to vector<8x128xf32>
    %31 = arith.subf %13, %30 : vector<8x128xf32>
    %32 = arith.truncf %31 : vector<8x128xf32> to vector<8x128xbf16>
    %cst_9 = arith.constant dense<0.000000e+00> : vector<8x128xf32>
    %33 = tpu.matmul %29, %28, %cst_9 {dimension_numbers = #tpu.dot_dimension_numbers<[1], [0], [0], [1], [0, 0, 1, 1], [], []>} : vector<8x128xbf16>, vector<128x128xbf16>, vector<8x128xf32> -> vector<8x128xf32>
    %cst_10 = arith.constant dense<0.000000e+00> : vector<8x128xf32>
    %34 = tpu.matmul %32, %28, %cst_10 {dimension_numbers = #tpu.dot_dimension_numbers<[1], [0], [0], [1], [0, 0, 1, 1], [], []>} : vector<8x128xbf16>, vector<128x128xbf16>, vector<8x128xf32> -> vector<8x128xf32>
    %35 = arith.addf %33, %34 : vector<8x128xf32>
    %36 = vector.extract_strided_slice %35 {offsets = [0, 0], sizes = [8, 8], strides = [1, 1]} : vector<8x128xf32> to vector<8x8xf32>
    %c0_11 = arith.constant 0 : index
    %c0_12 = arith.constant 0 : index
    %37 = vector.load %arg4[%c0_11, %c0_12] : memref<8x8xf32, #tpu.memory_space<vmem>>, vector<8x8xf32>
    tpu.vector_store %arg4[%c0_11, %c0_12], %36 {strides = array<i32>} : memref<8x8xf32, #tpu.memory_space<vmem>>, vector<8x8xf32>,
    return
  }
  func.func @transform_0(%arg0: i32) -> (i32, i32) {
    %c0_i32 = arith.constant 0 : i32
    %c0_i32_0 = arith.constant 0 : i32
    return %arg0, %c0_i32 : i32, i32
  }
  func.func @transform_1(%arg0: i32) -> (i32, i32) {
    %c0_i32 = arith.constant 0 : i32
    %c0_i32_0 = arith.constant 0 : i32
    return %arg0, %c0_i32 : i32, i32
  }
  func.func @transform_2(%arg0: i32) -> (i32, i32) {
    %c0_i32 = arith.constant 0 : i32
    %c0_i32_0 = arith.constant 0 : i32
    return %arg0, %c0_i32 : i32, i32
  }
  func.func @transform_3(%arg0: i32) -> (i32, i32) {
    %c0_i32 = arith.constant 0 : i32
    %c0_i32_0 = arith.constant 0 : i32
    return %arg0, %c0_i32 : i32, i32
  }
}

</mosaic_0001>

<llo_original>
// kernel: tpu_custom_call.1
$region0: #{tpu_custom_call.1}
  #allocation0 [shape = 'u32[]', space=smem, size = 0x4, offset = 0x4, fixed_abs, tag = 'smem constant byte address 0x4 - core index']
  #allocation1 [shape = 'u32[144,128]{1,0:T(1,128)}', space=vmem, size = 0x12000, scoped, tag = 'internal scratch']
  %s0 = inlined_call_operand.hbm [shape: f32[25,128], index: 0, kind: input, shape index: {}]
  %s1 = inlined_call_operand.hbm [shape: f32[25,128], index: 1, kind: input, shape index: {}]
  %s2 = inlined_call_operand.hbm [shape: f32[25,128], index: 2, kind: input, shape index: {}]
  %s3 = inlined_call_operand.vmem [shape: f32[25,8], index: 3, kind: output, shape index: {}]
  %s4 = sld [smem:[#allocation0]]
  $region57: #{tpu_custom_call.1} parent=0
    _
  %s6 = ssub.s32 1, %s4
  %s7 = scalar_select 0, %s6, %s4
  $region1: #{tpu_custom_call.1} parent=0
    #allocation2 [shape = 'u8[8192]{0}', space=vmem, size = 0x2000, scoped, tag = 'input window, operand 0']
    #allocation3 [shape = 's32[2]{0}', space=sflag, size = 0x8, scoped, tag = 'scoped memory for tpu_custom_call.1']
    #allocation4 [shape = 'u8[8192]{0}', space=vmem, size = 0x2000, scoped, tag = 'input window, operand 1']
    #allocation5 [shape = 's32[2]{0}', space=sflag, size = 0x8, scoped, tag = 'scoped memory for tpu_custom_call.1']
    #allocation6 [shape = 'u8[8192]{0}', space=vmem, size = 0x2000, scoped, tag = 'input window, operand 2']
    %8 = vsyncpa [#allocation3], 0
    %s9 = scalar_lea.sflag [#allocation3], 1
    %10 = vsyncpa %s9, 0
    %11 = vsyncpa [#allocation5], 0
    %s12 = scalar_lea.sflag [#allocation5], 1
    %13 = vsyncpa %s12, 0
    loop: start=0, step=1, limit=6
    $region2: #{tpu_custom_call.1} parent=1 // loop_pre_header
      _
    $region3: #{tpu_custom_call.1} parent=1 // loop_header
      %s15 = sphi 0, %s19
      %p16 = scmp.ge.s32.totalorder %s15, 6
      %s25 = sphi 0, %s27
      %s28 = sphi 0, %s25
      %s29 = sphi 0, %s28
      %s45 = sphi 0, %s29
      %s51 = sphi 0, %s53
      %s54 = sphi 0, %s51
      %s55 = sphi 0, %s54
      %s71 = sphi 0, %s55
      %s77 = sphi 0, %s79
      %s80 = sphi 0, %s77
      %s81 = sphi 0, %s80
      %s97 = sphi 0, %s81
      %s103 = sphi 0, %s105
      %s106 = sphi 0, %s103
      %s107 = sphi 0, %s106
      %s123 = sphi 0, %s107
    $region4: #{tpu_custom_call.1} parent=1 // loop_header_branch
      %18 = sbr.rel (%p16) target = $region8
    $region5: #{tpu_custom_call.1} parent=1 // loop_body
      %s20 = ssub.s32 %s15, 1
      %s21 = ssub.s32 %s15, 2
      %s22 = sadd.s32 %s15, 1
      %s23 = ssub.s32 %s15, %s22
      %p24 = scmp.eq.s32.totalorder %s23, 0
      %s26 = sadd.s32 %s25, 1
      %s27 = scalar_select %p24, %s25, %s26
      %p30 = pneg %p24
      %p31 = scmp.eq.s32.totalorder %s15, 3
      %p32 = por %p30, %p31
      %p33 = scmp.ne.s32.totalorder %s25, %s28
      %p34 = scmp.eq.s32.totalorder %s15, 0
      %p35 = por %p33, %p34
      %p36 = scmp.ne.s32.totalorder %s25, %s28
      %p37 = scmp.eq.s32.totalorder %s20, 3
      %p38 = por %p36, %p37
      %p39 = scmp.ne.s32.totalorder %s28, %s29
      %p40 = scmp.eq.s32.totalorder %s20, 0
      %p41 = por %p39, %p40
      %p42 = scmp.ne.s32.totalorder %s28, %s29
      %p43 = scmp.eq.s32.totalorder %s21, 3
      %p44 = por %p42, %p43
      %p46 = scmp.ne.s32.totalorder %s29, %s45
      %p47 = scmp.eq.s32.totalorder %s21, 0
      %p48 = por %p46, %p47
      %s49 = ssub.s32 %s15, %s22
      %p50 = scmp.eq.s32.totalorder %s49, 0
      %s52 = sadd.s32 %s51, 1
      %s53 = scalar_select %p50, %s51, %s52
      %p56 = pneg %p50
      %p57 = scmp.eq.s32.totalorder %s15, 3
      %p58 = por %p56, %p57
      %p59 = scmp.ne.s32.totalorder %s51, %s54
      %p60 = scmp.eq.s32.totalorder %s15, 0
      %p61 = por %p59, %p60
      %p62 = scmp.ne.s32.totalorder %s51, %s54
      %p63 = scmp.eq.s32.totalorder %s20, 3
      %p64 = por %p62, %p63
      %p65 = scmp.ne.s32.totalorder %s54, %s55
      %p66 = scmp.eq.s32.totalorder %s20, 0
      %p67 = por %p65, %p66
      %p68 = scmp.ne.s32.totalorder %s54, %s55
      %p69 = scmp.eq.s32.totalorder %s21, 3
      %p70 = por %p68, %p69
      %p72 = scmp.ne.s32.totalorder %s55, %s71
      %p73 = scmp.eq.s32.totalorder %s21, 0
      %p74 = por %p72, %p73
      %s75 = ssub.s32 %s15, %s22
      %p76 = scmp.eq.s32.totalorder %s75, 0
      %s78 = sadd.s32 %s77, 1
      %s79 = scalar_select %p76, %s77, %s78
      %p82 = pneg %p76
      %p83 = scmp.eq.s32.totalorder %s15, 3
      %p84 = por %p82, %p83
      %p85 = scmp.ne.s32.totalorder %s77, %s80
      %p86 = scmp.eq.s32.totalorder %s15, 0
      %p87 = por %p85, %p86
      %p88 = scmp.ne.s32.totalorder %s77, %s80
      %p89 = scmp.eq.s32.totalorder %s20, 3
      %p90 = por %p88, %p89
      %p91 = scmp.ne.s32.totalorder %s80, %s81
      %p92 = scmp.eq.s32.totalorder %s20, 0
      %p93 = por %p91, %p92
      %p94 = scmp.ne.s32.totalorder %s80, %s81
      %p95 = scmp.eq.s32.totalorder %s21, 3
      %p96 = por %p94, %p95
      %p98 = scmp.ne.s32.totalorder %s81, %s97
      %p99 = scmp.eq.s32.totalorder %s21, 0
      %p100 = por %p98, %p99
      %s101 = ssub.s32 %s15, %s22
      %p102 = scmp.eq.s32.totalorder %s101, 0
      %s104 = sadd.s32 %s103, 1
      %s105 = scalar_select %p102, %s103, %s104
      %p108 = pneg %p102
      %p109 = scmp.eq.s32.totalorder %s15, 3
      %p110 = por %p108, %p109
      %p111 = scmp.ne.s32.totalorder %s103, %s106
      %p112 = scmp.eq.s32.totalorder %s15, 0
      %p113 = por %p111, %p112
      %p114 = scmp.ne.s32.totalorder %s103, %s106
      %p115 = scmp.eq.s32.totalorder %s20, 3
      %p116 = por %p114, %p115
      %p117 = scmp.ne.s32.totalorder %s106, %s107
      %p118 = scmp.eq.s32.totalorder %s20, 0
      %p119 = por %p117, %p118
      %p120 = scmp.ne.s32.totalorder %s106, %s107
      %p121 = scmp.eq.s32.totalorder %s21, 3
      %p122 = por %p120, %p121
      %p124 = scmp.ne.s32.totalorder %s107, %s123
      %p125 = scmp.eq.s32.totalorder %s21, 0
      %p126 = por %p124, %p125
      %p127 = scmp.le.s32.totalorder 1, %s15
      %p128 = scmp.lt.s32.totalorder %s15, 5
      %p129 = pnand %p127, %p128
      %p130 = pneg %p129
      // Predicated region
      $region9: #{tpu_custom_call.1} parent=5 // pred_check
        _
      $region10: #{tpu_custom_call.1} parent=5 // pred_check_branch
        %132 = sbr.rel (%p129) target = $region12
      $region11: #{tpu_custom_call.1} parent=5 // pred_region
        %s133 = ssub.s32 %s15, 1
      $region12: #{tpu_custom_call.1} parent=5 // pred_fallthru
        _
      %p134 = scmp.lt.s32.totalorder %s15, 4
      // Predicated region
      $region13: #{tpu_custom_call.1} parent=5 // pred_check
        %p135 = pneg %p134
      $region14: #{tpu_custom_call.1} parent=5 // pred_check_branch
        %137 = sbr.rel (%p135) target = $region16
      $region15: #{tpu_custom_call.1} parent=5 // pred_region
        // Predicated region
        $region17: #{tpu_custom_call.1} parent=15 // pred_check
          %p138 = pneg %p35
        $region18: #{tpu_custom_call.1} parent=15 // pred_check_branch
          %140 = sbr.rel (%p138) target = $region20
        $region19: #{tpu_custom_call.1} parent=15 // pred_region
          %s141 = sand.u32 %s25, 1
          %s142 = scalar_lea.sflag [#allocation3], %s141
          %s143 = sand.u32 %s25, 1
          %s144 = smul.addr %s143, 8
          %s145 = scalar_lea.vmem [#allocation2], %s144
          %s147 = ssub.s32 128, 128
          %148 = vsyncadd %s142, %s147
          %s149 = smul.addr %s15, 128
          %s150 = scalar_lea.hbm %s0, %s149
          %s152 = sshll.u32 %s145, 4
          %s153 = int_to_ptr.vmem [resolvable:$true] %s152
          %155 = dma.hbm_to_vmem [thread:$0]  %s150, 128, %s153, %s142
        $region20: #{tpu_custom_call.1} parent=15 // pred_fallthru
          _
        // Predicated region
        $region21: #{tpu_custom_call.1} parent=15 // pred_check
          %p156 = pneg %p61
        $region22: #{tpu_custom_call.1} parent=15 // pred_check_branch
          %158 = sbr.rel (%p156) target = $region24
        $region23: #{tpu_custom_call.1} parent=15 // pred_region
          %s159 = sand.u32 %s15, 1
          %s160 = scalar_lea.sflag [#allocation5], %s159
          %s161 = sand.u32 %s51, 1
          %s162 = smul.addr %s161, 8
          %s163 = scalar_lea.vmem [#allocation4], %s162
          %s165 = ssub.s32 128, 128
          %166 = vsyncadd %s160, %s165
          %s167 = smul.addr %s15, 128
          %s168 = scalar_lea.hbm %s1, %s167
          %s170 = sshll.u32 %s163, 4
          %s171 = int_to_ptr.vmem [resolvable:$true] %s170
          %173 = dma.hbm_to_vmem [thread:$0]  %s168, 128, %s171, %s160
        $region24: #{tpu_custom_call.1} parent=15 // pred_fallthru
          _
        // Predicated region
        $region25: #{tpu_custom_call.1} parent=15 // pred_check
          %p174 = pneg %p87
        $region26: #{tpu_custom_call.1} parent=15 // pred_check_branch
          %176 = sbr.rel (%p174) target = $region28
        $region27: #{tpu_custom_call.1} parent=15 // pred_region
          %s177 = sand.u32 %s15, 1
          %s178 = scalar_lea.sflag [#allocation5], %s177
          %s179 = sand.u32 %s77, 1
          %s180 = smul.addr %s179, 8
          %s181 = scalar_lea.vmem [#allocation6], %s180
          %s183 = ssub.s32 128, 128
          %184 = vsyncadd %s178, %s183
          %s185 = smul.addr %s15, 128
          %s186 = scalar_lea.hbm %s2, %s185
          %s188 = sshll.u32 %s181, 4
          %s189 = int_to_ptr.vmem [resolvable:$true] %s188
          %191 = dma.hbm_to_vmem [thread:$0]  %s186, 128, %s189, %s178
        $region28: #{tpu_custom_call.1} parent=15 // pred_fallthru
          _
      $region16: #{tpu_custom_call.1} parent=5 // pred_fallthru
        _
      %p192 = scmp.le.s32.totalorder 1, %s15
      %p193 = scmp.lt.s32.totalorder %s15, 5
      %p194 = pnand %p192, %p193
      %p195 = pneg %p194
      // Predicated region
      $region29: #{tpu_custom_call.1} parent=5 // pred_check
        _
      $region30: #{tpu_custom_call.1} parent=5 // pred_check_branch
        %197 = sbr.rel (%p194) target = $region32
      $region31: #{tpu_custom_call.1} parent=5 // pred_region
        %s198 = ssub.s32 %s15, 1
        %s199 = sand.u32 %s28, 1
        %s200 = scalar_lea.sflag [#allocation3], %s199
        %s201 = sand.u32 %s28, 1
        %s202 = smul.addr %s201, 8
        %s203 = scalar_lea.vmem [#allocation2], %s202
        // Predicated region
        $region33: #{tpu_custom_call.1} parent=31 // pred_check
          %p204 = pneg %p41
        $region34: #{tpu_custom_call.1} parent=31 // pred_check_branch
          %206 = sbr.rel (%p204) target = $region36
        $region35: #{tpu_custom_call.1} parent=31 // pred_region
          %207 = dma.done %s200, 128
        $region36: #{tpu_custom_call.1} parent=31 // pred_fallthru
          _
        %s208 = sand.u32 %s20, 1
        %s209 = scalar_lea.sflag [#allocation5], %s208
        %s210 = sand.u32 %s54, 1
        %s211 = smul.addr %s210, 8
        %s212 = scalar_lea.vmem [#allocation4], %s211
        // Predicated region
        $region37: #{tpu_custom_call.1} parent=31 // pred_check
          %p213 = pneg %p67
        $region38: #{tpu_custom_call.1} parent=31 // pred_check_branch
          %215 = sbr.rel (%p213) target = $region40
        $region39: #{tpu_custom_call.1} parent=31 // pred_region
          %216 = dma.done %s209, 128
        $region40: #{tpu_custom_call.1} parent=31 // pred_fallthru
          _
        %s217 = sand.u32 %s20, 1
        %s218 = scalar_lea.sflag [#allocation5], %s217
        %s219 = sand.u32 %s80, 1
        %s220 = smul.addr %s219, 8
        %s221 = scalar_lea.vmem [#allocation6], %s220
        // Predicated region
        $region41: #{tpu_custom_call.1} parent=31 // pred_check
          %p222 = pneg %p93
        $region42: #{tpu_custom_call.1} parent=31 // pred_check_branch
          %224 = sbr.rel (%p222) target = $region44
        $region43: #{tpu_custom_call.1} parent=31 // pred_region
          %225 = dma.done %s218, 128
        $region44: #{tpu_custom_call.1} parent=31 // pred_fallthru
          _
        %s226 = sand.u32 %s28, 1
        %s227 = scalar_lea.sflag [#allocation3], %s226
        %s228 = sand.u32 %s28, 1
        %s229 = smul.addr %s228, 8
        %s230 = scalar_lea.vmem [#allocation2], %s229
        %p231 = pneg %p41
        %p232 = pneg %p38
        %s233 = sand.u32 %s20, 1
        %s234 = scalar_lea.sflag [#allocation5], %s233
        %s235 = sand.u32 %s54, 1
        %s236 = smul.addr %s235, 8
        %s237 = scalar_lea.vmem [#allocation4], %s236
        %p238 = pneg %p67
        %p239 = pneg %p64
        %s240 = sand.u32 %s20, 1
        %s241 = scalar_lea.sflag [#allocation5], %s240
        %s242 = sand.u32 %s80, 1
        %s243 = smul.addr %s242, 8
        %s244 = scalar_lea.vmem [#allocation6], %s243
        %p245 = pneg %p93
        %p246 = pneg %p90
        %p247 = pneg %p119
        %p248 = pneg %p116
        %p249 = scmp.lt.s32.totalorder %s20, 3
        %s250 = scalar_select %p249, %s20, 3
        %s251 = smul.addr %s250, 8
        %s252 = scalar_lea.vmem %s3, %s251
        %p253 = scmp.lt.s32.totalorder %s20, 3
        %s254 = scalar_select %p253, %s20, 3
        %s255 = smul.addr %s254, 8
        %s256 = scalar_lea.vmem %s3, %s255
        %v258 = vld [vmem:[%s203] sm:$0xff]
        %v259 = vld [vmem:[%s212] sm:$0xff]
        %v260 = vmax.f32 %v258, 0.0
        %v261 = vmul.f32 %v258, %v259
        %v262 = vsub.f32 %v260, %v261
        %v263 = vand.u32 2147483647, %v258
        %v264 = vsub.f32 0.0, %v263
        %v265 = vmul.f32 %v264, 1.442695
        %v266 = vpow.pop %v265
        %v267 = vadd.f32 %v266, 1.0
        %v268 = vlog2.pop %v267
        %v269 = vmul.f32 %v268, 0.6931472
        %v270 = vmul.f32 -0.5, %v266
        %v271 = vadd.f32 %v270, 1.0
        %v272 = vmul.f32 %v271, %v266
        %v273 = vand.u32 2147483647, %v266
        %vm274 = vcmp.lt.f32.partialorder %v273, 0.0004427343
        %v275 = vsel %vm274, %v272, %v269
        %v276 = vadd.f32 %v262, %v275
        %v277 = vld [vmem:[%s221] sm:$0xff]
        %v278 = vmul.f32 %v276, %v277
        %v279 = vlaneseq
        %v280 = vshrl.u32 %v279, 7
        %v281 = vadd.s32 %v280, 8
        %v282 = vadd.s32 %v280, 16
        %v283 = vadd.s32 %v280, 24
        %v284 = vadd.s32 %v280, 32
        %v285 = vadd.s32 %v280, 40
        %v286 = vadd.s32 %v280, 48
        %v287 = vadd.s32 %v280, 56
        %v288 = vadd.s32 %v280, 64
        %v289 = vadd.s32 %v280, 72
        %v290 = vadd.s32 %v280, 80
        %v291 = vadd.s32 %v280, 88
        %v292 = vadd.s32 %v280, 96
        %v293 = vadd.s32 %v280, 104
        %v294 = vadd.s32 %v280, 112
        %v295 = vadd.s32 %v280, 120
        %v296 = vlaneseq
        %v297 = vand.u32 %v296, 127
        %v298 = vmul.u32 %v297, 16
        %vm299 = vcmp.ge.s32.totalorder %v280, %v298
        %vm300 = vcmp.ge.s32.totalorder %v281, %v298
        %vm301 = vcmp.ge.s32.totalorder %v282, %v298
        %vm302 = vcmp.ge.s32.totalorder %v283, %v298
        %vm303 = vcmp.ge.s32.totalorder %v284, %v298
        %vm304 = vcmp.ge.s32.totalorder %v285, %v298
        %vm305 = vcmp.ge.s32.totalorder %v286, %v298
        %vm306 = vcmp.ge.s32.totalorder %v287, %v298
        %vm307 = vcmp.ge.s32.totalorder %v288, %v298
        %vm308 = vcmp.ge.s32.totalorder %v289, %v298
        %vm309 = vcmp.ge.s32.totalorder %v290, %v298
        %vm310 = vcmp.ge.s32.totalorder %v291, %v298
        %vm311 = vcmp.ge.s32.totalorder %v292, %v298
        %vm312 = vcmp.ge.s32.totalorder %v293, %v298
        %vm313 = vcmp.ge.s32.totalorder %v294, %v298
        %vm314 = vcmp.ge.s32.totalorder %v295, %v298
        %v315 = vadd.s32 %v297, 1
        %v316 = vmul.u32 %v315, 16
        %vm317 = vcmp.lt.s32.totalorder %v280, %v316
        %vm318 = vcmp.lt.s32.totalorder %v281, %v316
        %vm319 = vcmp.lt.s32.totalorder %v282, %v316
        %vm320 = vcmp.lt.s32.totalorder %v283, %v316
        %vm321 = vcmp.lt.s32.totalorder %v284, %v316
        %vm322 = vcmp.lt.s32.totalorder %v285, %v316
        %vm323 = vcmp.lt.s32.totalorder %v286, %v316
        %vm324 = vcmp.lt.s32.totalorder %v287, %v316
        %vm325 = vcmp.lt.s32.totalorder %v288, %v316
        %vm326 = vcmp.lt.s32.totalorder %v289, %v316
        %vm327 = vcmp.lt.s32.totalorder %v290, %v316
        %vm328 = vcmp.lt.s32.totalorder %v291, %v316
        %vm329 = vcmp.lt.s32.totalorder %v292, %v316
        %vm330 = vcmp.lt.s32.totalorder %v293, %v316
        %vm331 = vcmp.lt.s32.totalorder %v294, %v316
        %vm332 = vcmp.lt.s32.totalorder %v295, %v316
        %vm333 = vmand %vm299, %vm317
        %vm334 = vmand %vm300, %vm318
        %vm335 = vmand %vm301, %vm319
        %vm336 = vmand %vm302, %vm320
        %vm337 = vmand %vm303, %vm321
        %vm338 = vmand %vm304, %vm322
        %vm339 = vmand %vm305, %vm323
        %vm340 = vmand %vm306, %vm324
        %vm341 = vmand %vm307, %vm325
        %vm342 = vmand %vm308, %vm326
        %vm343 = vmand %vm309, %vm327
        %vm344 = vmand %vm310, %vm328
        %vm345 = vmand %vm311, %vm329
        %vm346 = vmand %vm312, %vm330
        %vm347 = vmand %vm313, %vm331
        %vm348 = vmand %vm314, %vm332
        %v349 = vsel %vm333, 0.0625, 0.0
        %v350 = vsel %vm334, 0.0625, 0.0
        %v351 = vsel %vm335, 0.0625, 0.0
        %v352 = vsel %vm336, 0.0625, 0.0
        %v353 = vsel %vm337, 0.0625, 0.0
        %v354 = vsel %vm338, 0.0625, 0.0
        %v355 = vsel %vm339, 0.0625, 0.0
        %v356 = vsel %vm340, 0.0625, 0.0
        %v357 = vsel %vm341, 0.0625, 0.0
        %v358 = vsel %vm342, 0.0625, 0.0
        %v359 = vsel %vm343, 0.0625, 0.0
        %v360 = vsel %vm344, 0.0625, 0.0
        %v361 = vsel %vm345, 0.0625, 0.0
        %v362 = vsel %vm346, 0.0625, 0.0
        %v363 = vsel %vm347, 0.0625, 0.0
        %v364 = vsel %vm348, 0.0625, 0.0
        %v365 = vpack.c.bf16 %v350, %v349
        %v366 = vpack.c.bf16 %v352, %v351
        %v367 = vpack.c.bf16 %v354, %v353
        %v368 = vpack.c.bf16 %v356, %v355
        %v369 = vpack.c.bf16 %v358, %v357
        %v370 = vpack.c.bf16 %v360, %v359
        %v371 = vpack.c.bf16 %v362, %v361
        %v372 = vpack.c.bf16 %v364, %v363
        %v373 = vpack.c.bf16 %v278, %v278
        %v374 = vunpack.c.l.bf16 %v373
        %v375 = vsub.f32 %v278, %v374
        %v376 = vpack.c.bf16 %v375, %v375
        %377 = vmatprep.subr.bf16.mxu0 0
        %378 = vmatpush1.bf16.msra.mxu0 %v365
        %379 = vmatprep.subr.bf16.mxu0 0
        %380 = vmatpush1.bf16.msra.mxu0 %v366
        %381 = vmatprep.subr.bf16.mxu0 0
        %382 = vmatpush1.bf16.msra.mxu0 %v367
        %383 = vmatprep.subr.bf16.mxu0 0
        %384 = vmatpush1.bf16.msra.mxu0 %v368
        %385 = vmatprep.subr.bf16.mxu0 0
        %386 = vmatpush1.bf16.msra.mxu0 %v369
        %387 = vmatprep.subr.bf16.mxu0 0
        %388 = vmatpush1.bf16.msra.mxu0 %v370
        %389 = vmatprep.subr.bf16.mxu0 0
        %390 = vmatpush1.bf16.msra.mxu0 %v371
        %391 = vmatprep.subr.bf16.mxu0 0
        %392 = vmatpush1.bf16.msra.mxu0 %v372
        %393 = vmatprep.subr.bf16.mxu0 0
        %394 = vmatpush1.bf16.msra.mxu0 0
        %395 = vmatprep.subr.bf16.mxu0 0
        %396 = vmatpush1.bf16.msra.mxu0 0
        %397 = vmatprep.subr.bf16.mxu0 0
        %398 = vmatpush1.bf16.msra.mxu0 0
        %399 = vmatprep.subr.bf16.mxu0 0
        %400 = vmatpush1.bf16.msra.mxu0 0
        %401 = vmatprep.subr.bf16.mxu0 0
        %402 = vmatpush1.bf16.msra.mxu0 0
        %403 = vmatprep.subr.bf16.mxu0 0
        %404 = vmatpush1.bf16.msra.mxu0 0
        %405 = vmatprep.subr.bf16.mxu0 0
        %406 = vmatpush1.bf16.msra.mxu0 0
        %407 = vmatprep.subr.bf16.mxu0 0
        %408 = vmatpush1.bf16.msra.mxu0 0
        %409 = vmatprep.mubr.bf16.mxu0 0
        %410 = vmatmul.mubr.bf16.gmra.mrb[0].mxu0 %v376
        %v411 = vpop.f32.mrb[0].mxu0
        %v412 = vadd.f32 0.0, %v411
        %v413 = vpop.f32.mrb[0].mxu0
        %v414 = vpop.f32.mrb[0].mxu0
        %v415 = vpop.f32.mrb[0].mxu0
        %416 = vdwg.mxu0
        %417 = vmatprep.subr.bf16.mxu0 0
        %418 = vmatpush1.bf16.msra.mxu0 %v365
        %419 = vmatprep.subr.bf16.mxu0 0
        %420 = vmatpush1.bf16.msra.mxu0 %v366
        %421 = vmatprep.subr.bf16.mxu0 0
        %422 = vmatpush1.bf16.msra.mxu0 %v367
        %423 = vmatprep.subr.bf16.mxu0 0
        %424 = vmatpush1.bf16.msra.mxu0 %v368
        %425 = vmatprep.subr.bf16.mxu0 0
        %426 = vmatpush1.bf16.msra.mxu0 %v369
        %427 = vmatprep.subr.bf16.mxu0 0
        %428 = vmatpush1.bf16.msra.mxu0 %v370
        %429 = vmatprep.subr.bf16.mxu0 0
        %430 = vmatpush1.bf16.msra.mxu0 %v371
        %431 = vmatprep.subr.bf16.mxu0 0
        %432 = vmatpush1.bf16.msra.mxu0 %v372
        %433 = vmatprep.subr.bf16.mxu0 0
        %434 = vmatpush1.bf16.msra.mxu0 0
        %435 = vmatprep.subr.bf16.mxu0 0
        %436 = vmatpush1.bf16.msra.mxu0 0
        %437 = vmatprep.subr.bf16.mxu0 0
        %438 = vmatpush1.bf16.msra.mxu0 0
        %439 = vmatprep.subr.bf16.mxu0 0
        %440 = vmatpush1.bf16.msra.mxu0 0
        %441 = vmatprep.subr.bf16.mxu0 0
        %442 = vmatpush1.bf16.msra.mxu0 0
        %443 = vmatprep.subr.bf16.mxu0 0
        %444 = vmatpush1.bf16.msra.mxu0 0
        %445 = vmatprep.subr.bf16.mxu0 0
        %446 = vmatpush1.bf16.msra.mxu0 0
        %447 = vmatprep.subr.bf16.mxu0 0
        %448 = vmatpush1.bf16.msra.mxu0 0
        %449 = vmatprep.mubr.bf16.mxu0 0
        %450 = vmatmul.mubr.bf16.gmra.mrb[0].mxu0 %v373
        %v451 = vpop.f32.mrb[0].mxu0
        %v452 = vadd.f32 %v412, %v451
        %v453 = vpop.f32.mrb[0].mxu0
        %v454 = vpop.f32.mrb[0].mxu0
        %v455 = vpop.f32.mrb[0].mxu0
        %456 = vdwg.mxu0
        %vm457 = vcmask 64512
        %458 = vst.msk [vmem:[%s256] sm:$0xff] %vm457, %v452
        %p459 = scmp.lt.s32.totalorder %s20, 3
        %s460 = scalar_select %p459, %s20, 3
        %s461 = smul.addr %s460, 8
        %s462 = scalar_lea.vmem %s3, %s461
        // Predicated region
        $region45: #{tpu_custom_call.1} parent=31 // pred_check
          %p463 = pneg %p116
        $region46: #{tpu_custom_call.1} parent=31 // pred_check_branch
          %465 = sbr.rel (%p463) target = $region48
        $region47: #{tpu_custom_call.1} parent=31 // pred_region
          _
        $region48: #{tpu_custom_call.1} parent=31 // pred_fallthru
          _
      $region32: #{tpu_custom_call.1} parent=5 // pred_fallthru
        _
      %p466 = scmp.le.s32.totalorder 2, %s15
      // Predicated region
      $region49: #{tpu_custom_call.1} parent=5 // pred_check
        %p467 = pneg %p466
      $region50: #{tpu_custom_call.1} parent=5 // pred_check_branch
        %469 = sbr.rel (%p467) target = $region52
      $region51: #{tpu_custom_call.1} parent=5 // pred_region
        %s470 = ssub.s32 %s15, 2
        // Predicated region
        $region53: #{tpu_custom_call.1} parent=51 // pred_check
          %p471 = pneg %p122
        $region54: #{tpu_custom_call.1} parent=51 // pred_check_branch
          %473 = sbr.rel (%p471) target = $region56
        $region55: #{tpu_custom_call.1} parent=51 // pred_region
          %p474 = scmp.lt.s32.totalorder %s21, 3
          %s475 = scalar_select %p474, %s21, 3
          %s476 = smul.addr %s475, 8
          %s477 = scalar_lea.vmem %s3, %s476
        $region56: #{tpu_custom_call.1} parent=51 // pred_fallthru
          _
      $region52: #{tpu_custom_call.1} parent=5 // pred_fallthru
        _
    $region6: #{tpu_custom_call.1} parent=1 // loop_footer
      %s19 = sadd.s32 1, %s15
    $region7: #{tpu_custom_call.1} parent=1 // loop_footer_branch
      %14 = sbr.rel target = $region3
    $region8: #{tpu_custom_call.1} parent=1 // loop_exit
      _
    %478 = vsyncpa [#allocation3], 1
    %s479 = scalar_lea.sflag [#allocation3], 1
    %480 = vsyncpa %s479, 1
    %481 = vsyncpa [#allocation5], 1
    %s482 = scalar_lea.sflag [#allocation5], 1
    %483 = vsyncpa %s482, 1

</llo_original>
